<compile_context>
chip_gen: v5e
topology: v5e:2x2
jax: 0.10.0
libtpu: 0.0.40
codegen_flags: <defaults>
</compile_context>

<pallas_src>
import math

import jax
import jax.numpy as jnp
from jax.experimental import pallas as pl
from jax.experimental.pallas import tpu as pltpu

_VMEM = pl.BlockSpec(memory_space=pltpu.MemorySpace.VMEM)

# Matmul-operand dtype.  float32 keeps tight numerical parity with the PyTorch
# reference; set to jnp.bfloat16 on v6e/v7x for ~2x MXU throughput and half the
# weight/scratch bytes (f32 accumulation is kept via preferred_element_type either
# way; BatchNorm statistics always stay in f32).
MATMUL_DTYPE = jnp.float32


def _same_pad(K):
    """Conv1dSamePadding geometry for stride=1, dilation=1.
    torch: total pad = K-1; odd leftover zero goes on the RIGHT (F.pad([0,1]) then
    symmetric padding//2)  =>  left = (K-1)//2, right = K-1-left."""
    left = (K - 1) // 2
    return left, (K - 1) - left


def _make_fcn_kernel(block_meta, out_channels):
    """Fused FCNBaseline kernel.

    block_meta: tuple of (K, Cin, Cout) per ConvBlock (static).
    Ref order: x, w_0..w_{n-1} (each reshaped to (K*Cin, Cout)), final_w,
               packed_small_params, out, im2col_scratch.
    packed_small_params rows: [0,n) gamma_i, [n,2n) beta_i, row 2n = final bias.
    """
    n_blocks = len(block_meta)

    def kernel(x_ref, *refs):
        w_refs = refs[:n_blocks]
        fw_ref = refs[n_blocks]
        sp_ref = refs[n_blocks + 1]
        o_ref = refs[n_blocks + 2]
        im_ref = refs[n_blocks + 3]
        B, L, _ = x_ref.shape
        n_rows = float(B * L)

        def conv_bn_relu(i, h):
            K, Cin, Cout = block_meta[i]
            KC = K * Cin
            left, right = _same_pad(K)
            # ---- im2col: K shifted copies of h concatenated on the lane axis ----
            # Zero only the halo rows; interior rows are fully overwritten below.
            if left > 0:
                nz = min(left, L)
                im_ref[:, :nz, :KC] = jnp.zeros((B, nz, KC), im_ref.dtype)
            if right > 0:
                nz = min(right, L)
                im_ref[:, L - nz:, :KC] = jnp.zeros((B, nz, KC), im_ref.dtype)
            hc = h.astype(im_ref.dtype)
            for k in range(K):                      # static unroll over taps
                shift = k - left
                lo, hi = max(0, -shift), min(L, L - shift)
                if hi > lo:
                    im_ref[:, lo:hi, k * Cin:(k + 1) * Cin] = \
                        hc[:, lo + shift:hi + shift, :]
            # ---- one MXU matmul over all taps and batches, f32 accumulation ----
            acc = jnp.dot(im_ref[:, :, :KC].reshape(B * L, KC), w_refs[i][...],
                          preferred_element_type=jnp.float32)
            # (conv bias omitted: exactly cancelled by the BatchNorm mean subtraction)
            # ---- BatchNorm1d, training-mode batch stats, one reduction pass ----
            s1 = jnp.sum(acc, axis=0, keepdims=True)
            s2 = jnp.sum(acc * acc, axis=0, keepdims=True)
            mean = s1 * (1.0 / n_rows)
            var = jnp.maximum(s2 * (1.0 / n_rows) - mean * mean, 0.0)
            gamma = sp_ref[i:i + 1, :Cout]
            beta = sp_ref[n_blocks + i:n_blocks + i + 1, :Cout]
            y = (acc - mean) * jax.lax.rsqrt(var + 1e-5) * gamma + beta
            return jnp.maximum(y, 0.0).reshape(B, L, Cout)        # ReLU

        h = x_ref[...]
        for i in range(n_blocks):
            h = conv_bn_relu(i, h)
        hm = jnp.mean(h, axis=1)                    # global average pool -> (B, C)
        fb = sp_ref[2 * n_blocks:2 * n_blocks + 1, :out_channels]
        o_ref[...] = jnp.dot(hm.astype(fw_ref.dtype), fw_ref[...],
                             preferred_element_type=jnp.float32) + fb

    return kernel


def fcn_forward(x_nlc, p):
    """FCNBaseline forward (input already NLC) as a single fused pallas_call."""
    B, L, _ = x_nlc.shape
    blocks = p["blocks"]
    n_blocks = len(blocks)
    O = p["final_w"].shape[1]

    block_meta, w_args, max_kc = [], [], 0
    for blk in blocks:
        K, Cin, Cout = blk["w"].shape
        block_meta.append((K, Cin, Cout))
        max_kc = max(max_kc, K * Cin)
        w_args.append(blk["w"].reshape(K * Cin, Cout).astype(MATMUL_DTYPE))

    # Pack every tiny (1, C) parameter into ONE small input tile.
    maxc = max(max(m[2] for m in block_meta), O)
    sp = jnp.zeros((2 * n_blocks + 1, maxc), jnp.float32)
    for i, blk in enumerate(blocks):
        cout = block_meta[i][2]
        sp = sp.at[i, :cout].set(blk["gamma"][0])
        sp = sp.at[n_blocks + i, :cout].set(blk["beta"][0])
    sp = sp.at[2 * n_blocks, :O].set(p["final_b"][0])

    args = [x_nlc] + w_args + [p["final_w"].astype(MATMUL_DTYPE), sp]

    return pl.pallas_call(
        _make_fcn_kernel(tuple(block_meta), O),
        out_shape=jax.ShapeDtypeStruct((B, O), jnp.float32),
        in_specs=[_VMEM] * len(args),
        out_specs=_VMEM,
        # One SHARED im2col scratch, reused by every block (peak scratch = max, not sum).
        scratch_shapes=[pltpu.VMEM((B, L, max_kc), MATMUL_DTYPE)],
    )(*args)


@jax.jit
def custom_model_forward(x_dat, x_ref, params):
    """CustomModel.forward: y = fcn(swapaxes(x_dat, 2, 1)); return (y, x_dat, x_ref).
    The kernel is natively NLC (channels on lanes), so the swapaxes is a layout no-op."""
    y = fcn_forward(x_dat, params["fcn"])
    return y, x_dat, x_ref


# ------------------------------ parameter init ------------------------------

def _uniform(key, shape, bound):
    return jax.random.uniform(key, shape, jnp.float32, -bound, bound)


def init_convblock(key, cin, cout, k):
    kw, kb = jax.random.split(key)
    bound = 1.0 / math.sqrt(cin * k)
    return {"w": _uniform(kw, (k, cin, cout), bound),      # (K, Cin, Cout)
            "b": _uniform(kb, (1, cout), bound),           # used by the reference only
            "gamma": jnp.ones((1, cout), jnp.float32),
            "beta": jnp.zeros((1, cout), jnp.float32)}


def init_fcn(key, in_channels, out_channels, channels, kernels):
    chans = [in_channels] + list(channels)
    keys = jax.random.split(key, len(kernels) + 1)
    blocks = [init_convblock(keys[i], chans[i], chans[i + 1], kernels[i])
              for i in range(len(kernels))]
    kw, kb = jax.random.split(keys[-1])
    bound = 1.0 / math.sqrt(chans[-1])
    return {"blocks": blocks,
            "final_w": _uniform(kw, (chans[-1], out_channels), bound),
            "final_b": _uniform(kb, (1, out_channels), bound)}


# --------------------------- pure-JAX reference ------------------------------

def _fcn_reference(x, p):
    """Pure-JAX FCNBaseline (train-mode BatchNorm, conv bias included) for validation."""
    h = x
    for blk in p["blocks"]:
        K = blk["w"].shape[0]
        left = (K - 1) // 2
        hp = jnp.pad(h, ((0, 0), (left, (K - 1) - left), (0, 0)))
        y = jax.lax.conv_general_dilated(
            hp, blk["w"], window_strides=(1,), padding="VALID",
            dimension_numbers=("NWC", "WIO", "NWC")) + blk["b"]
        mean = jnp.mean(y, axis=(0, 1), keepdims=True)
        var = jnp.mean(jnp.square(y - mean), axis=(0, 1), keepdims=True)
        y = (y - mean) * jax.lax.rsqrt(var + 1e-5) * blk["gamma"] + blk["beta"]
        h = jnp.maximum(y, 0.0)
    return jnp.dot(jnp.mean(h, axis=1), p["final_w"]) + p["final_b"]


# ----------------------------------- main -----------------------------------

if __name__ == "__main__":
    B, L = 2, 16
    in_channels, out_channels = 3, 11          # FCNBaseline defaults
    channels, kernels = [20, 20], [8, 8]       # FCNBaseline defaults (strides = 1)

    key = jax.random.PRNGKey(0)
    k_fcn, kx1, kx2 = jax.random.split(key, 3)
    params = {"fcn": init_fcn(k_fcn, in_channels, out_channels, channels, kernels)}

    x_dat = jax.random.normal(kx1, (B, L, in_channels), jnp.float32)  # (B, L, C) pre-swap
    x_ref = jax.random.normal(kx2, (B, L, in_channels), jnp.float32)  # passed through

    y, x_dat_out, x_ref_out = custom_model_forward(x_dat, x_ref, params)
    jax.block_until_ready((y, x_dat_out, x_ref_out))

    assert y.shape == (B, out_channels)
    assert x_dat_out.shape == x_dat.shape and x_ref_out.shape == x_ref.shape

    y_ref = _fcn_reference(x_dat, params["fcn"])
    err = float(jnp.max(jnp.abs(y - y_ref)))
    assert jnp.allclose(y, y_ref, atol=1e-3, rtol=1e-3), f"max abs err {err}"
    print("KERNEL_OK")
</pallas_src>

<mosaic_0001>
module attributes {stable_mosaic.version = 11 : i64} {
  func.func @kernel(%arg0: memref<2x16x3xf32, #tpu.memory_space<vmem>>, %arg1: memref<24x20xf32, #tpu.memory_space<vmem>>, %arg2: memref<160x20xf32, #tpu.memory_space<vmem>>, %arg3: memref<20x11xf32, #tpu.memory_space<vmem>>, %arg4: memref<5x20xf32, #tpu.memory_space<vmem>>, %arg5: memref<2x11xf32, #tpu.memory_space<vmem>>, %arg6: memref<2x16x160xf32, #tpu.memory_space<vmem>>) attributes {dimension_semantics = [], scalar_prefetch = 0 : i64, scratch_operands = 1 : i64, tpu.core_type = #tpu.core_type<tc>} {
    %c0 = arith.constant 0 : index
    %c0_0 = arith.constant 0 : index
    %c0_1 = arith.constant 0 : index
    %0 = vector.load %arg0[%c0, %c0_0, %c0_1] : memref<2x16x3xf32, #tpu.memory_space<vmem>>, vector<2x16x3xf32>
    %cst = arith.constant 0.000000e+00 : f32
    %1 = vector.broadcast %cst : f32 to vector<2x3x24xf32>
    %c0_2 = arith.constant 0 : index
    %c0_3 = arith.constant 0 : index
    %c0_4 = arith.constant 0 : index
    %2 = vector.load %arg6[%c0_2, %c0_3, %c0_4] : memref<2x16x160xf32, #tpu.memory_space<vmem>>, vector<2x3x24xf32>
    tpu.vector_store %arg6[%c0_2, %c0_3, %c0_4], %1 {strides = array<i32>} : memref<2x16x160xf32, #tpu.memory_space<vmem>>, vector<2x3x24xf32>,
    %cst_5 = arith.constant 0.000000e+00 : f32
    %3 = vector.broadcast %cst_5 : f32 to vector<2x4x24xf32>
    %c0_6 = arith.constant 0 : index
    %c12 = arith.constant 12 : index
    %c0_7 = arith.constant 0 : index
    %4 = vector.load %arg6[%c0_6, %c12, %c0_7] : memref<2x16x160xf32, #tpu.memory_space<vmem>>, vector<2x4x24xf32>
    tpu.vector_store %arg6[%c0_6, %c12, %c0_7], %3 {strides = array<i32>} : memref<2x16x160xf32, #tpu.memory_space<vmem>>, vector<2x4x24xf32>,
    %5 = vector.extract_strided_slice %0 {offsets = [0, 0, 0], sizes = [2, 13, 3], strides = [1, 1, 1]} : vector<2x16x3xf32> to vector<2x13x3xf32>
    %c0_8 = arith.constant 0 : index
    %c3 = arith.constant 3 : index
    %c0_9 = arith.constant 0 : index
    %6 = vector.load %arg6[%c0_8, %c3, %c0_9] : memref<2x16x160xf32, #tpu.memory_space<vmem>>, vector<2x13x3xf32>
    tpu.vector_store %arg6[%c0_8, %c3, %c0_9], %5 {strides = array<i32>} : memref<2x16x160xf32, #tpu.memory_space<vmem>>, vector<2x13x3xf32>,
    %7 = vector.extract_strided_slice %0 {offsets = [0, 0, 0], sizes = [2, 14, 3], strides = [1, 1, 1]} : vector<2x16x3xf32> to vector<2x14x3xf32>
    %c0_10 = arith.constant 0 : index
    %c2 = arith.constant 2 : index
    %c3_11 = arith.constant 3 : index
    %8 = vector.load %arg6[%c0_10, %c2, %c3_11] : memref<2x16x160xf32, #tpu.memory_space<vmem>>, vector<2x14x3xf32>
    tpu.vector_store %arg6[%c0_10, %c2, %c3_11], %7 {strides = array<i32>} : memref<2x16x160xf32, #tpu.memory_space<vmem>>, vector<2x14x3xf32>,
    %9 = vector.extract_strided_slice %0 {offsets = [0, 0, 0], sizes = [2, 15, 3], strides = [1, 1, 1]} : vector<2x16x3xf32> to vector<2x15x3xf32>
    %c0_12 = arith.constant 0 : index
    %c1 = arith.constant 1 : index
    %c6 = arith.constant 6 : index
    %10 = vector.load %arg6[%c0_12, %c1, %c6] : memref<2x16x160xf32, #tpu.memory_space<vmem>>, vector<2x15x3xf32>
    tpu.vector_store %arg6[%c0_12, %c1, %c6], %9 {strides = array<i32>} : memref<2x16x160xf32, #tpu.memory_space<vmem>>, vector<2x15x3xf32>,
    %c0_13 = arith.constant 0 : index
    %c0_14 = arith.constant 0 : index
    %c9 = arith.constant 9 : index
    %11 = vector.load %arg6[%c0_13, %c0_14, %c9] : memref<2x16x160xf32, #tpu.memory_space<vmem>>, vector<2x16x3xf32>
    tpu.vector_store %arg6[%c0_13, %c0_14, %c9], %0 {strides = array<i32>} : memref<2x16x160xf32, #tpu.memory_space<vmem>>, vector<2x16x3xf32>,
    %12 = vector.extract_strided_slice %0 {offsets = [0, 1, 0], sizes = [2, 15, 3], strides = [1, 1, 1]} : vector<2x16x3xf32> to vector<2x15x3xf32>
    %c0_15 = arith.constant 0 : index
    %c0_16 = arith.constant 0 : index
    %c12_17 = arith.constant 12 : index
    %13 = vector.load %arg6[%c0_15, %c0_16, %c12_17] : memref<2x16x160xf32, #tpu.memory_space<vmem>>, vector<2x15x3xf32>
    tpu.vector_store %arg6[%c0_15, %c0_16, %c12_17], %12 {strides = array<i32>} : memref<2x16x160xf32, #tpu.memory_space<vmem>>, vector<2x15x3xf32>,
    %14 = vector.extract_strided_slice %0 {offsets = [0, 2, 0], sizes = [2, 14, 3], strides = [1, 1, 1]} : vector<2x16x3xf32> to vector<2x14x3xf32>
    %c0_18 = arith.constant 0 : index
    %c0_19 = arith.constant 0 : index
    %c15 = arith.constant 15 : index
    %15 = vector.load %arg6[%c0_18, %c0_19, %c15] : memref<2x16x160xf32, #tpu.memory_space<vmem>>, vector<2x14x3xf32>
    tpu.vector_store %arg6[%c0_18, %c0_19, %c15], %14 {strides = array<i32>} : memref<2x16x160xf32, #tpu.memory_space<vmem>>, vector<2x14x3xf32>,
    %16 = vector.extract_strided_slice %0 {offsets = [0, 3, 0], sizes = [2, 13, 3], strides = [1, 1, 1]} : vector<2x16x3xf32> to vector<2x13x3xf32>
    %c0_20 = arith.constant 0 : index
    %c0_21 = arith.constant 0 : index
    %c18 = arith.constant 18 : index
    %17 = vector.load %arg6[%c0_20, %c0_21, %c18] : memref<2x16x160xf32, #tpu.memory_space<vmem>>, vector<2x13x3xf32>
    tpu.vector_store %arg6[%c0_20, %c0_21, %c18], %16 {strides = array<i32>} : memref<2x16x160xf32, #tpu.memory_space<vmem>>, vector<2x13x3xf32>,
    %18 = vector.extract_strided_slice %0 {offsets = [0, 4, 0], sizes = [2, 12, 3], strides = [1, 1, 1]} : vector<2x16x3xf32> to vector<2x12x3xf32>
    %c0_22 = arith.constant 0 : index
    %c0_23 = arith.constant 0 : index
    %c21 = arith.constant 21 : index
    %19 = vector.load %arg6[%c0_22, %c0_23, %c21] : memref<2x16x160xf32, #tpu.memory_space<vmem>>, vector<2x12x3xf32>
    tpu.vector_store %arg6[%c0_22, %c0_23, %c21], %18 {strides = array<i32>} : memref<2x16x160xf32, #tpu.memory_space<vmem>>, vector<2x12x3xf32>,
    %c0_24 = arith.constant 0 : index
    %c0_25 = arith.constant 0 : index
    %c0_26 = arith.constant 0 : index
    %20 = vector.load %arg6[%c0_24, %c0_25, %c0_26] : memref<2x16x160xf32, #tpu.memory_space<vmem>>, vector<2x16x24xf32>
    %21 = vector.shape_cast %20 : vector<2x16x24xf32> to vector<32x24xf32>
    %c0_27 = arith.constant 0 : index
    %c0_28 = arith.constant 0 : index
    %22 = vector.load %arg1[%c0_27, %c0_28] : memref<24x20xf32, #tpu.memory_space<vmem>>, vector<24x20xf32>
    %cst_29 = arith.constant dense<0.000000e+00> : vector<32x20xf32>
    %23 = tpu.matmul %21, %22, %cst_29 {dimension_numbers = #tpu.dot_dimension_numbers<[1], [0], [0], [1], [0, 0, 1, 1], [], []>} : vector<32x24xf32>, vector<24x20xf32>, vector<32x20xf32> -> vector<32x20xf32>
    %cst_30 = arith.constant dense<0.000000e+00> : vector<20xf32>
    %24 = vector.multi_reduction <add>, %23, %cst_30 [0] : vector<32x20xf32> to vector<20xf32>
    %25 = vector.shape_cast %24 : vector<20xf32> to vector<1x20xf32>
    %26 = arith.mulf %23, %23 : vector<32x20xf32>
    %cst_31 = arith.constant dense<0.000000e+00> : vector<20xf32>
    %27 = vector.multi_reduction <add>, %26, %cst_31 [0] : vector<32x20xf32> to vector<20xf32>
    %28 = vector.shape_cast %27 : vector<20xf32> to vector<1x20xf32>
    %cst_32 = arith.constant 3.125000e-02 : f32
    %29 = vector.broadcast %cst_32 : f32 to vector<1x20xf32>
    %30 = arith.mulf %25, %29 : vector<1x20xf32>
    %cst_33 = arith.constant 3.125000e-02 : f32
    %31 = vector.broadcast %cst_33 : f32 to vector<1x20xf32>
    %32 = arith.mulf %28, %31 : vector<1x20xf32>
    %33 = arith.mulf %30, %30 : vector<1x20xf32>
    %34 = arith.subf %32, %33 : vector<1x20xf32>
    %cst_34 = arith.constant 0.000000e+00 : f32
    %35 = vector.broadcast %cst_34 : f32 to vector<1x20xf32>
    %36 = arith.maximumf %34, %35 : vector<1x20xf32>
    %c0_35 = arith.constant 0 : index
    %c0_36 = arith.constant 0 : index
    %37 = vector.load %arg4[%c0_35, %c0_36] : memref<5x20xf32, #tpu.memory_space<vmem>>, vector<1x20xf32>
    %c2_37 = arith.constant 2 : index
    %c0_38 = arith.constant 0 : index
    %38 = vector.load %arg4[%c2_37, %c0_38] : memref<5x20xf32, #tpu.memory_space<vmem>>, vector<1x20xf32>
    %39 = vector.broadcast %30 : vector<1x20xf32> to vector<32x20xf32>
    %40 = arith.subf %23, %39 : vector<32x20xf32>
    %cst_39 = arith.constant 9.99999974E-6 : f32
    %41 = vector.broadcast %cst_39 : f32 to vector<1x20xf32>
    %42 = arith.addf %36, %41 : vector<1x20xf32>
    %43 = math.rsqrt %42 : vector<1x20xf32>
    %44 = vector.broadcast %43 : vector<1x20xf32> to vector<32x20xf32>
    %45 = arith.mulf %40, %44 : vector<32x20xf32>
    %46 = vector.broadcast %37 : vector<1x20xf32> to vector<32x20xf32>
    %47 = arith.mulf %45, %46 : vector<32x20xf32>
    %48 = vector.broadcast %38 : vector<1x20xf32> to vector<32x20xf32>
    %49 = arith.addf %47, %48 : vector<32x20xf32>
    %cst_40 = arith.constant 0.000000e+00 : f32
    %50 = vector.broadcast %cst_40 : f32 to vector<32x20xf32>
    %51 = arith.maximumf %49, %50 : vector<32x20xf32>
    %52 = vector.shape_cast %51 : vector<32x20xf32> to vector<2x16x20xf32>
    %cst_41 = arith.constant 0.000000e+00 : f32
    %53 = vector.broadcast %cst_41 : f32 to vector<2x3x160xf32>
    %c0_42 = arith.constant 0 : index
    %c0_43 = arith.constant 0 : index
    %c0_44 = arith.constant 0 : index
    %54 = vector.load %arg6[%c0_42, %c0_43, %c0_44] : memref<2x16x160xf32, #tpu.memory_space<vmem>>, vector<2x3x160xf32>
    tpu.vector_store %arg6[%c0_42, %c0_43, %c0_44], %53 {strides = array<i32>} : memref<2x16x160xf32, #tpu.memory_space<vmem>>, vector<2x3x160xf32>,
    %cst_45 = arith.constant 0.000000e+00 : f32
    %55 = vector.broadcast %cst_45 : f32 to vector<2x4x160xf32>
    %c0_46 = arith.constant 0 : index
    %c12_47 = arith.constant 12 : index
    %c0_48 = arith.constant 0 : index
    %56 = vector.load %arg6[%c0_46, %c12_47, %c0_48] : memref<2x16x160xf32, #tpu.memory_space<vmem>>, vector<2x4x160xf32>
    tpu.vector_store %arg6[%c0_46, %c12_47, %c0_48], %55 {strides = array<i32>} : memref<2x16x160xf32, #tpu.memory_space<vmem>>, vector<2x4x160xf32>,
    %57 = vector.extract_strided_slice %52 {offsets = [0, 0, 0], sizes = [2, 13, 20], strides = [1, 1, 1]} : vector<2x16x20xf32> to vector<2x13x20xf32>
    %c0_49 = arith.constant 0 : index
    %c3_50 = arith.constant 3 : index
    %c0_51 = arith.constant 0 : index
    %58 = vector.load %arg6[%c0_49, %c3_50, %c0_51] : memref<2x16x160xf32, #tpu.memory_space<vmem>>, vector<2x13x20xf32>
    tpu.vector_store %arg6[%c0_49, %c3_50, %c0_51], %57 {strides = array<i32>} : memref<2x16x160xf32, #tpu.memory_space<vmem>>, vector<2x13x20xf32>,
    %59 = vector.extract_strided_slice %52 {offsets = [0, 0, 0], sizes = [2, 14, 20], strides = [1, 1, 1]} : vector<2x16x20xf32> to vector<2x14x20xf32>
    %c0_52 = arith.constant 0 : index
    %c2_53 = arith.constant 2 : index
    %c20 = arith.constant 20 : index
    %60 = vector.load %arg6[%c0_52, %c2_53, %c20] : memref<2x16x160xf32, #tpu.memory_space<vmem>>, vector<2x14x20xf32>
    tpu.vector_store %arg6[%c0_52, %c2_53, %c20], %59 {strides = array<i32>} : memref<2x16x160xf32, #tpu.memory_space<vmem>>, vector<2x14x20xf32>,
    %61 = vector.extract_strided_slice %52 {offsets = [0, 0, 0], sizes = [2, 15, 20], strides = [1, 1, 1]} : vector<2x16x20xf32> to vector<2x15x20xf32>
    %c0_54 = arith.constant 0 : index
    %c1_55 = arith.constant 1 : index
    %c40 = arith.constant 40 : index
    %62 = vector.load %arg6[%c0_54, %c1_55, %c40] : memref<2x16x160xf32, #tpu.memory_space<vmem>>, vector<2x15x20xf32>
    tpu.vector_store %arg6[%c0_54, %c1_55, %c40], %61 {strides = array<i32>} : memref<2x16x160xf32, #tpu.memory_space<vmem>>, vector<2x15x20xf32>,
    %c0_56 = arith.constant 0 : index
    %c0_57 = arith.constant 0 : index
    %c60 = arith.constant 60 : index
    %63 = vector.load %arg6[%c0_56, %c0_57, %c60] : memref<2x16x160xf32, #tpu.memory_space<vmem>>, vector<2x16x20xf32>
    tpu.vector_store %arg6[%c0_56, %c0_57, %c60], %52 {strides = array<i32>} : memref<2x16x160xf32, #tpu.memory_space<vmem>>, vector<2x16x20xf32>,
    %64 = vector.extract_strided_slice %52 {offsets = [0, 1, 0], sizes = [2, 15, 20], strides = [1, 1, 1]} : vector<2x16x20xf32> to vector<2x15x20xf32>
    %c0_58 = arith.constant 0 : index
    %c0_59 = arith.constant 0 : index
    %c80 = arith.constant 80 : index
    %65 = vector.load %arg6[%c0_58, %c0_59, %c80] : memref<2x16x160xf32, #tpu.memory_space<vmem>>, vector<2x15x20xf32>
    tpu.vector_store %arg6[%c0_58, %c0_59, %c80], %64 {strides = array<i32>} : memref<2x16x160xf32, #tpu.memory_space<vmem>>, vector<2x15x20xf32>,
    %66 = vector.extract_strided_slice %52 {offsets = [0, 2, 0], sizes = [2, 14, 20], strides = [1, 1, 1]} : vector<2x16x20xf32> to vector<2x14x20xf32>
    %c0_60 = arith.constant 0 : index
    %c0_61 = arith.constant 0 : index
    %c100 = arith.constant 100 : index
    %67 = vector.load %arg6[%c0_60, %c0_61, %c100] : memref<2x16x160xf32, #tpu.memory_space<vmem>>, vector<2x14x20xf32>
    tpu.vector_store %arg6[%c0_60, %c0_61, %c100], %66 {strides = array<i32>} : memref<2x16x160xf32, #tpu.memory_space<vmem>>, vector<2x14x20xf32>,
    %68 = vector.extract_strided_slice %52 {offsets = [0, 3, 0], sizes = [2, 13, 20], strides = [1, 1, 1]} : vector<2x16x20xf32> to vector<2x13x20xf32>
    %c0_62 = arith.constant 0 : index
    %c0_63 = arith.constant 0 : index
    %c120 = arith.constant 120 : index
    %69 = vector.load %arg6[%c0_62, %c0_63, %c120] : memref<2x16x160xf32, #tpu.memory_space<vmem>>, vector<2x13x20xf32>
    tpu.vector_store %arg6[%c0_62, %c0_63, %c120], %68 {strides = array<i32>} : memref<2x16x160xf32, #tpu.memory_space<vmem>>, vector<2x13x20xf32>,
    %70 = vector.extract_strided_slice %52 {offsets = [0, 4, 0], sizes = [2, 12, 20], strides = [1, 1, 1]} : vector<2x16x20xf32> to vector<2x12x20xf32>
    %c0_64 = arith.constant 0 : index
    %c0_65 = arith.constant 0 : index
    %c140 = arith.constant 140 : index
    %71 = vector.load %arg6[%c0_64, %c0_65, %c140] : memref<2x16x160xf32, #tpu.memory_space<vmem>>, vector<2x12x20xf32>
    tpu.vector_store %arg6[%c0_64, %c0_65, %c140], %70 {strides = array<i32>} : memref<2x16x160xf32, #tpu.memory_space<vmem>>, vector<2x12x20xf32>,
    %c0_66 = arith.constant 0 : index
    %c0_67 = arith.constant 0 : index
    %c0_68 = arith.constant 0 : index
    %72 = vector.load %arg6[%c0_66, %c0_67, %c0_68] : memref<2x16x160xf32, #tpu.memory_space<vmem>>, vector<2x16x160xf32>
    %73 = vector.shape_cast %72 : vector<2x16x160xf32> to vector<32x160xf32>
    %c0_69 = arith.constant 0 : index
    %c0_70 = arith.constant 0 : index
    %74 = vector.load %arg2[%c0_69, %c0_70] : memref<160x20xf32, #tpu.memory_space<vmem>>, vector<160x20xf32>
    %cst_71 = arith.constant dense<0.000000e+00> : vector<32x20xf32>
    %75 = tpu.matmul %73, %74, %cst_71 {dimension_numbers = #tpu.dot_dimension_numbers<[1], [0], [0], [1], [0, 0, 1, 1], [], []>} : vector<32x160xf32>, vector<160x20xf32>, vector<32x20xf32> -> vector<32x20xf32>
    %cst_72 = arith.constant dense<0.000000e+00> : vector<20xf32>
    %76 = vector.multi_reduction <add>, %75, %cst_72 [0] : vector<32x20xf32> to vector<20xf32>
    %77 = vector.shape_cast %76 : vector<20xf32> to vector<1x20xf32>
    %78 = arith.mulf %75, %75 : vector<32x20xf32>
    %cst_73 = arith.constant dense<0.000000e+00> : vector<20xf32>
    %79 = vector.multi_reduction <add>, %78, %cst_73 [0] : vector<32x20xf32> to vector<20xf32>
    %80 = vector.shape_cast %79 : vector<20xf32> to vector<1x20xf32>
    %cst_74 = arith.constant 3.125000e-02 : f32
    %81 = vector.broadcast %cst_74 : f32 to vector<1x20xf32>
    %82 = arith.mulf %77, %81 : vector<1x20xf32>
    %cst_75 = arith.constant 3.125000e-02 : f32
    %83 = vector.broadcast %cst_75 : f32 to vector<1x20xf32>
    %84 = arith.mulf %80, %83 : vector<1x20xf32>
    %85 = arith.mulf %82, %82 : vector<1x20xf32>
    %86 = arith.subf %84, %85 : vector<1x20xf32>
    %cst_76 = arith.constant 0.000000e+00 : f32
    %87 = vector.broadcast %cst_76 : f32 to vector<1x20xf32>
    %88 = arith.maximumf %86, %87 : vector<1x20xf32>
    %c1_77 = arith.constant 1 : index
    %c0_78 = arith.constant 0 : index
    %89 = vector.load %arg4[%c1_77, %c0_78] : memref<5x20xf32, #tpu.memory_space<vmem>>, vector<1x20xf32>
    %c3_79 = arith.constant 3 : index
    %c0_80 = arith.constant 0 : index
    %90 = vector.load %arg4[%c3_79, %c0_80] : memref<5x20xf32, #tpu.memory_space<vmem>>, vector<1x20xf32>
    %91 = vector.broadcast %82 : vector<1x20xf32> to vector<32x20xf32>
    %92 = arith.subf %75, %91 : vector<32x20xf32>
    %cst_81 = arith.constant 9.99999974E-6 : f32
    %93 = vector.broadcast %cst_81 : f32 to vector<1x20xf32>
    %94 = arith.addf %88, %93 : vector<1x20xf32>
    %95 = math.rsqrt %94 : vector<1x20xf32>
    %96 = vector.broadcast %95 : vector<1x20xf32> to vector<32x20xf32>
    %97 = arith.mulf %92, %96 : vector<32x20xf32>
    %98 = vector.broadcast %89 : vector<1x20xf32> to vector<32x20xf32>
    %99 = arith.mulf %97, %98 : vector<32x20xf32>
    %100 = vector.broadcast %90 : vector<1x20xf32> to vector<32x20xf32>
    %101 = arith.addf %99, %100 : vector<32x20xf32>
    %cst_82 = arith.constant 0.000000e+00 : f32
    %102 = vector.broadcast %cst_82 : f32 to vector<32x20xf32>
    %103 = arith.maximumf %101, %102 : vector<32x20xf32>
    %104 = vector.shape_cast %103 : vector<32x20xf32> to vector<2x16x20xf32>
    %cst_83 = arith.constant dense<0.000000e+00> : vector<2x20xf32>
    %105 = vector.multi_reduction <add>, %104, %cst_83 [1] : vector<2x16x20xf32> to vector<2x20xf32>
    %cst_84 = arith.constant 1.600000e+01 : f32
    %106 = vector.broadcast %cst_84 : f32 to vector<2x20xf32>
    %107 = arith.divf %105, %106 : vector<2x20xf32>
    %c4 = arith.constant 4 : index
    %c0_85 = arith.constant 0 : index
    %108 = vector.load %arg4[%c4, %c0_85] : memref<5x20xf32, #tpu.memory_space<vmem>>, vector<1x11xf32>
    %c0_86 = arith.constant 0 : index
    %c0_87 = arith.constant 0 : index
    %109 = vector.load %arg3[%c0_86, %c0_87] : memref<20x11xf32, #tpu.memory_space<vmem>>, vector<20x11xf32>
    %cst_88 = arith.constant dense<0.000000e+00> : vector<2x11xf32>
    %110 = tpu.matmul %107, %109, %cst_88 {dimension_numbers = #tpu.dot_dimension_numbers<[1], [0], [0], [1], [0, 0, 1, 1], [], []>} : vector<2x20xf32>, vector<20x11xf32>, vector<2x11xf32> -> vector<2x11xf32>
    %111 = vector.broadcast %108 : vector<1x11xf32> to vector<2x11xf32>
    %112 = arith.addf %110, %111 : vector<2x11xf32>
    %c0_89 = arith.constant 0 : index
    %c0_90 = arith.constant 0 : index
    %113 = vector.load %arg5[%c0_89, %c0_90] : memref<2x11xf32, #tpu.memory_space<vmem>>, vector<2x11xf32>
    tpu.vector_store %arg5[%c0_89, %c0_90], %112 {strides = array<i32>} : memref<2x11xf32, #tpu.memory_space<vmem>>, vector<2x11xf32>,
    return
  }
}

</mosaic_0001>

<llo_original>
// kernel: custom_model_forward.1
$region0: #{custom_model_forward.1}
  #allocation0 [shape = 'u32[]', space=smem, size = 0x4, offset = 0x4, fixed_abs, tag = 'smem constant byte address 0x4 - core index']
  #allocation1 [shape = 'u32[72,128]{1,0:T(1,128)}', space=vmem, size = 0x9000, scoped, tag = 'internal scratch']
  #allocation2 [shape = 'f32[2,16,160]{2,1,0:T(8,128)}', space=vmem, size = 0x8000, scoped, tag = 'scratch operand']
  %s0 = inlined_call_operand.vmem [shape: f32[2,16,3], index: 0, kind: input, shape index: {}]
  %s1 = inlined_call_operand.vmem [shape: f32[24,20], index: 1, kind: input, shape index: {}]
  %s2 = inlined_call_operand.vmem [shape: f32[160,20], index: 2, kind: input, shape index: {}]
  %s3 = inlined_call_operand.vmem [shape: f32[20,11], index: 3, kind: input, shape index: {}]
  %s4 = inlined_call_operand.vmem [shape: f32[5,20], index: 4, kind: input, shape index: {}]
  %s5 = inlined_call_operand.hbm [shape: f32[2,11], index: 5, kind: output, shape index: {}]
  %s6 = sld [smem:[#allocation0]]
  $region30: #{custom_model_forward.1} parent=0
    _
  %s8 = ssub.s32 1, %s6
  %s9 = scalar_select 0, %s8, %s6
  $region1: #{custom_model_forward.1} parent=0
    #allocation3 [shape = 'u8[1024]{0}', space=vmem, size = 0x400, scoped, tag = 'output window, operand 0, single buffered']
    #allocation4 [shape = 's32[1]{0}', space=sflag, size = 0x4, scoped, tag = 'scoped memory for custom_model_forward.1']
    %10 = vsyncpa [#allocation4], 0
    // Predicated region
    $region2: #{custom_model_forward.1} parent=1 // pred_check
      _
    $region3: #{custom_model_forward.1} parent=1 // pred_check_branch
      %12 = sbr.rel (0) target = $region5
    $region4: #{custom_model_forward.1} parent=1 // pred_region
      _
    $region5: #{custom_model_forward.1} parent=1 // pred_fallthru
      _
    // Predicated region
    $region6: #{custom_model_forward.1} parent=1 // pred_check
      _
    $region7: #{custom_model_forward.1} parent=1 // pred_check_branch
      %14 = sbr.rel (0) target = $region9
    $region8: #{custom_model_forward.1} parent=1 // pred_region
      _
    $region9: #{custom_model_forward.1} parent=1 // pred_fallthru
      _
    // Predicated region
    $region10: #{custom_model_forward.1} parent=1 // pred_check
      _
    $region11: #{custom_model_forward.1} parent=1 // pred_check_branch
      %16 = sbr.rel (0) target = $region13
    $region12: #{custom_model_forward.1} parent=1 // pred_region
      _
    $region13: #{custom_model_forward.1} parent=1 // pred_fallthru
      _
    // Predicated region
    $region14: #{custom_model_forward.1} parent=1 // pred_check
      _
    $region15: #{custom_model_forward.1} parent=1 // pred_check_branch
      %18 = sbr.rel (0) target = $region17
    $region16: #{custom_model_forward.1} parent=1 // pred_region
      _
    $region17: #{custom_model_forward.1} parent=1 // pred_fallthru
      _
    // Predicated region
    $region18: #{custom_model_forward.1} parent=1 // pred_check
      _
    $region19: #{custom_model_forward.1} parent=1 // pred_check_branch
      %20 = sbr.rel (0) target = $region21
    $region20: #{custom_model_forward.1} parent=1 // pred_region
      _
    $region21: #{custom_model_forward.1} parent=1 // pred_fallthru
      _
    %v21 = vld [vmem:[%s0] sm:$0xff]
    %v22 = vld [vmem:[%s0 + $0x8] sm:$0xff]
    %v23 = vld [vmem:[%s0 + $0x10] sm:$0xff]
    %v24 = vld [vmem:[%s0 + $0x18] sm:$0xff]
    %vm25 = vcmask 190464
    %26 = vst.msk [vmem:[#allocation2] sm:$0x7] %vm25, 0.0
    %27 = vst.msk [vmem:[#allocation2 + $0x20] sm:$0x7] %vm25, 0.0
    %vm28 = vcmask 195588
    %29 = vst.msk [vmem:[#allocation2 + $0x10] sm:$0xf0] %vm28, 0.0
    %30 = vst.msk [vmem:[#allocation2 + $0x30] sm:$0xf0] %vm28, 0.0
    %vm35 = vcmask 1042432
    %v36 = vrot.slane %v21, 5
    %v37 = vrot.slane %v22, 5
    %v38 = vsel %vm35, %v36, %v37
    %v39 = vrot.slane %v23, 5
    %v40 = vrot.slane %v24, 5
    %v41 = vsel %vm35, %v39, %v40
    %vm46 = vcmask 23555
    %47 = vst.msk [vmem:[#allocation2] sm:$0xf8] %vm46, %v36
    %vm48 = vcmask 23552
    %49 = vst.msk [vmem:[#allocation2 + $0x10] sm:$0xff] %vm48, %v38
    %50 = vst.msk [vmem:[#allocation2 + $0x20] sm:$0xf8] %vm46, %v39
    %51 = vst.msk [vmem:[#allocation2 + $0x30] sm:$0xff] %vm48, %v41
    %vm52 = vcmask 1041408
    %v53 = vrot.slane %v21, 6
    %v54 = vrot.slane %v22, 6
    %v55 = vsel %vm52, %v53, %v54
    %v56 = vrot.slane %v23, 6
    %v57 = vrot.slane %v24, 6
    %v58 = vsel %vm52, %v56, %v57
    %59 = vrot.lane.b32.xlu0 %v53, 3
    %v60 = vpop.permute.xlu0 %59
    %61 = vrot.lane.b32.xlu0 %v55, 3
    %v62 = vpop.permute.xlu0 %61
    %63 = vrot.lane.b32.xlu0 %v56, 3
    %v64 = vpop.permute.xlu0 %63
    %65 = vrot.lane.b32.xlu0 %v58, 3
    %v66 = vpop.permute.xlu0 %65
    %vm71 = vcmask 48154
    %72 = vst.msk [vmem:[#allocation2] sm:$0xfc] %vm71, %v60
    %vm73 = vcmask 48152
    %74 = vst.msk [vmem:[#allocation2 + $0x10] sm:$0xff] %vm73, %v62
    %75 = vst.msk [vmem:[#allocation2 + $0x20] sm:$0xfc] %vm71, %v64
    %76 = vst.msk [vmem:[#allocation2 + $0x30] sm:$0xff] %vm73, %v66
    %vm77 = vcmask 1040384
    %v78 = vrot.slane %v21, 7
    %v79 = vrot.slane %v22, 7
    %v80 = vsel %vm77, %v78, %v79
    %v81 = vrot.slane %v23, 7
    %v82 = vrot.slane %v24, 7
    %v83 = vsel %vm77, %v81, %v82
    %84 = vrot.lane.b32.xlu0 %v78, 6
    %v85 = vpop.permute.xlu0 %84
    %86 = vrot.lane.b32.xlu0 %v80, 6
    %v87 = vpop.permute.xlu0 %86
    %88 = vrot.lane.b32.xlu0 %v81, 6
    %v89 = vpop.permute.xlu0 %88
    %90 = vrot.lane.b32.xlu0 %v83, 6
    %v91 = vpop.permute.xlu0 %90
    %vm96 = vcmask 72753
    %97 = vst.msk [vmem:[#allocation2] sm:$0xfe] %vm96, %v85
    %vm98 = vcmask 72752
    %99 = vst.msk [vmem:[#allocation2 + $0x10] sm:$0xff] %vm98, %v87
    %100 = vst.msk [vmem:[#allocation2 + $0x20] sm:$0xfe] %vm96, %v89
    %101 = vst.msk [vmem:[#allocation2 + $0x30] sm:$0xff] %vm98, %v91
    %102 = vrot.lane.b32.xlu0 %v21, 9
    %v103 = vpop.permute.xlu0 %102
    %104 = vrot.lane.b32.xlu0 %v22, 9
    %v105 = vpop.permute.xlu0 %104
    %106 = vrot.lane.b32.xlu0 %v23, 9
    %v107 = vpop.permute.xlu0 %106
    %108 = vrot.lane.b32.xlu0 %v24, 9
    %v109 = vpop.permute.xlu0 %108
    %vm114 = vcmask 97352
    %115 = vst.msk [vmem:[#allocation2] sm:$0xff] %vm114, %v103
    %116 = vst.msk [vmem:[#allocation2 + $0x10] sm:$0xff] %vm114, %v105
    %117 = vst.msk [vmem:[#allocation2 + $0x20] sm:$0xff] %vm114, %v107
    %118 = vst.msk [vmem:[#allocation2 + $0x30] sm:$0xff] %vm114, %v109
    %vm119 = vcmask 1046528
    %v120 = vrot.slane %v21, 1
    %v121 = vrot.slane %v22, 1
    %v122 = vsel %vm119, %v120, %v121
    %v123 = vrot.slane %v23, 1
    %v124 = vrot.slane %v24, 1
    %v125 = vsel %vm119, %v123, %v124
    %126 = vrot.lane.b32.xlu0 %v122, 12
    %v127 = vpop.permute.xlu0 %126
    %128 = vrot.lane.b32.xlu0 %v121, 12
    %v129 = vpop.permute.xlu0 %128
    %130 = vrot.lane.b32.xlu0 %v125, 12
    %v131 = vpop.permute.xlu0 %130
    %132 = vrot.lane.b32.xlu0 %v124, 12
    %v133 = vpop.permute.xlu0 %132
    %vm138 = vcmask 121952
    %139 = vst.msk [vmem:[#allocation2] sm:$0xff] %vm138, %v127
    %vm140 = vcmask 120928
    %141 = vst.msk [vmem:[#allocation2 + $0x10] sm:$0x7f] %vm140, %v129
    %142 = vst.msk [vmem:[#allocation2 + $0x20] sm:$0xff] %vm138, %v131
    %143 = vst.msk [vmem:[#allocation2 + $0x30] sm:$0x7f] %vm140, %v133
    %vm144 = vcmask 1045504
    %v145 = vrot.slane %v21, 2
    %v146 = vrot.slane %v22, 2
    %v147 = vsel %vm144, %v145, %v146
    %v148 = vrot.slane %v23, 2
    %v149 = vrot.slane %v24, 2
    %v150 = vsel %vm144, %v148, %v149
    %151 = vrot.lane.b32.xlu0 %v147, 15
    %v152 = vpop.permute.xlu0 %151
    %153 = vrot.lane.b32.xlu0 %v146, 15
    %v154 = vpop.permute.xlu0 %153
    %155 = vrot.lane.b32.xlu0 %v150, 15
    %v156 = vpop.permute.xlu0 %155
    %157 = vrot.lane.b32.xlu0 %v149, 15
    %v158 = vpop.permute.xlu0 %157
    %vm163 = vcmask 146552
    %164 = vst.msk [vmem:[#allocation2] sm:$0xff] %vm163, %v152
    %vm165 = vcmask 144504
    %166 = vst.msk [vmem:[#allocation2 + $0x10] sm:$0x3f] %vm165, %v154
    %167 = vst.msk [vmem:[#allocation2 + $0x20] sm:$0xff] %vm163, %v156
    %168 = vst.msk [vmem:[#allocation2 + $0x30] sm:$0x3f] %vm165, %v158
    %vm169 = vcmask 1044480
    %v170 = vrot.slane %v21, 3
    %v171 = vrot.slane %v22, 3
    %v172 = vsel %vm169, %v170, %v171
    %v173 = vrot.slane %v23, 3
    %v174 = vrot.slane %v24, 3
    %v175 = vsel %vm169, %v173, %v174
    %176 = vrot.lane.b32.xlu0 %v172, 18
    %v177 = vpop.permute.xlu0 %176
    %178 = vrot.lane.b32.xlu0 %v171, 18
    %v179 = vpop.permute.xlu0 %178
    %180 = vrot.lane.b32.xlu0 %v175, 18
    %v181 = vpop.permute.xlu0 %180
    %182 = vrot.lane.b32.xlu0 %v174, 18
    %v183 = vpop.permute.xlu0 %182
    %vm188 = vcmask 171152
    %189 = vst.msk [vmem:[#allocation2] sm:$0xff] %vm188, %v177
    %vm190 = vcmask 168080
    %191 = vst.msk [vmem:[#allocation2 + $0x10] sm:$0x1f] %vm190, %v179
    %192 = vst.msk [vmem:[#allocation2 + $0x20] sm:$0xff] %vm188, %v181
    %193 = vst.msk [vmem:[#allocation2 + $0x30] sm:$0x1f] %vm190, %v183
    %vm194 = vcmask 1043456
    %v195 = vrot.slane %v21, 4
    %v196 = vrot.slane %v22, 4
    %v197 = vsel %vm194, %v195, %v196
    %v198 = vrot.slane %v23, 4
    %v199 = vrot.slane %v24, 4
    %v200 = vsel %vm194, %v198, %v199
    %201 = vrot.lane.b32.xlu0 %v197, 21
    %v202 = vpop.permute.xlu0 %201
    %203 = vrot.lane.b32.xlu0 %v196, 21
    %v204 = vpop.permute.xlu0 %203
    %205 = vrot.lane.b32.xlu0 %v200, 21
    %v206 = vpop.permute.xlu0 %205
    %207 = vrot.lane.b32.xlu0 %v199, 21
    %v208 = vpop.permute.xlu0 %207
    %vm213 = vcmask 195752
    %214 = vst.msk [vmem:[#allocation2] sm:$0xff] %vm213, %v202
    %vm215 = vcmask 191656
    %216 = vst.msk [vmem:[#allocation2 + $0x10] sm:$0xf] %vm215, %v204
    %217 = vst.msk [vmem:[#allocation2 + $0x20] sm:$0xff] %vm213, %v206
    %218 = vst.msk [vmem:[#allocation2 + $0x30] sm:$0xf] %vm215, %v208
    %v219 = vld [vmem:[#allocation2] sm:$0xff]
    %v220 = vld [vmem:[#allocation2 + $0x10] sm:$0xff]
    %v221 = vld [vmem:[#allocation2 + $0x20] sm:$0xff]
    %v222 = vld [vmem:[#allocation2 + $0x30] sm:$0xff]
    %v223 = vld [vmem:[%s1] sm:$0xff]
    %v224 = vld [vmem:[%s1 + $0x8] sm:$0xff]
    %v225 = vld [vmem:[%s1 + $0x10] sm:$0xff]
    %vm226 = vcmask 195584
    %v228 = vsel %vm226, %v219, 0
    %v231 = vsel %vm226, %v220, 0
    %v234 = vsel %vm226, %v221, 0
    %v237 = vsel %vm226, %v222, 0
    %239 = vmatpush.msra.mxu0 0.0
    %240 = vmatpush.msra.mxu0 0.0
    %241 = vmatpush.msra.mxu0 0.0
    %242 = vmatpush.msra.mxu0 0.0
    %243 = vmatpush.msra.mxu0 0.0
    %244 = vmatpush.msra.mxu0 0.0
    %245 = vmatpush.msra.mxu0 0.0
    %246 = vmatpush.msra.mxu0 0.0
    %247 = vmatpush.msra.mxu0 0.0
    %248 = vmatpush.msra.mxu0 0.0
    %249 = vmatpush.msra.mxu0 0.0
    %250 = vmatpush.msra.mxu0 0.0
    %251 = vmatpush.msra.mxu0 0.0
    %252 = vmatpush.msra.mxu0 %v225
    %253 = vmatpush.msra.mxu0 %v224
    %254 = vmatpush.msra.mxu0 %v223
    %255 = vmatmul.f32.gmra.mxu0 %v228
    %v256 = vpop.f32.mrf.mxu0
    %v257 = vadd.f32 0.0, %v256
    %258 = vmatmul.f32.gmra.mxu0 %v231
    %v259 = vpop.f32.mrf.mxu0
    %v260 = vadd.f32 0.0, %v259
    %261 = vmatmul.f32.gmra.mxu0 %v234
    %v262 = vpop.f32.mrf.mxu0
    %v263 = vadd.f32 0.0, %v262
    %264 = vmatmul.f32.gmra.mxu0 %v237
    %v265 = vpop.f32.mrf.mxu0
    %v266 = vadd.f32 0.0, %v265
    %267 = vdwg.mxu0
    %vm268 = vcmask 162816
    %v269 = vsel %vm268, %v257, 0.0
    %v270 = vsel %vm268, %v260, 0.0
    %v271 = vadd.f32 %v269, %v270
    %v272 = vsel %vm268, %v263, 0.0
    %v273 = vadd.f32 %v271, %v272
    %v274 = vsel %vm268, %v266, 0.0
    %v275 = vadd.f32 %v273, %v274
    %v276 = vrot.slane %v275, 4
    %v277 = vadd.f32 %v275, %v276
    %v278 = vrot.slane %v277, 2
    %v279 = vadd.f32 %v277, %v278
    %v280 = vrot.slane %v279, 1
    %v281 = vadd.f32 %v279, %v280
    %v282 = vmul.f32 %v257, %v257
    %v283 = vmul.f32 %v260, %v260
    %v284 = vmul.f32 %v263, %v263
    %v285 = vmul.f32 %v266, %v266
    %v286 = vsel %vm268, %v282, 0.0
    %v287 = vsel %vm268, %v283, 0.0
    %v288 = vadd.f32 %v286, %v287
    %v289 = vsel %vm268, %v284, 0.0
    %v290 = vadd.f32 %v288, %v289
    %v291 = vsel %vm268, %v285, 0.0
    %v292 = vadd.f32 %v290, %v291
    %v293 = vrot.slane %v292, 4
    %v294 = vadd.f32 %v292, %v293
    %v295 = vrot.slane %v294, 2
    %v296 = vadd.f32 %v294, %v295
    %v297 = vrot.slane %v296, 1
    %v298 = vadd.f32 %v296, %v297
    %v299 = vmul.f32 %v281, 0.03125
    %v300 = vmul.f32 %v298, 0.03125
    %v301 = vmul.f32 %v299, %v299
    %v302 = vsub.f32 %v300, %v301
    %v303 = vmax.f32 %v302, 0.0
    %v304 = vld [vmem:[%s4] sm:$0x1]
    %v305 = vld [vmem:[%s4 + $0x2] sm:$0x1]
    %v306 = vsub.f32 %v257, %v299
    %v307 = vsub.f32 %v260, %v299
    %v308 = vsub.f32 %v263, %v299
    %v309 = vsub.f32 %v266, %v299
    %v310 = vadd.f32 %v303, 1e-05
    %v311 = vrsqrt.pop %v310
    %v312 = vmul.f32 %v311, %v310
    %v313 = vmul.f32 %v312, %v311
    %v314 = vmul.f32 0.5, %v313
    %v315 = vsub.f32 1.5, %v314
    %v316 = vmul.f32 %v311, %v315
    %vm317 = vweird.f32 %v310
    %vm318 = vweird.f32 %v311
    %vm319 = vmor %vm317, %vm318
    %v320 = vsel %vm319, %v311, %v316
    %v321 = vmul.f32 %v306, %v320
    %v322 = vmul.f32 %v307, %v320
    %v323 = vmul.f32 %v308, %v320
    %v324 = vmul.f32 %v309, %v320
    %v325 = vperm.slane %v304, 0
    %v326 = vmul.f32 %v321, %v325
    %v327 = vmul.f32 %v322, %v325
    %v328 = vmul.f32 %v323, %v325
    %v329 = vmul.f32 %v324, %v325
    %v330 = vperm.slane %v305, 0
    %v331 = vadd.f32 %v326, %v330
    %v332 = vadd.f32 %v327, %v330
    %v333 = vadd.f32 %v328, %v330
    %v334 = vadd.f32 %v329, %v330
    %v335 = vmax.f32 %v331, 0.0
    %v336 = vmax.f32 %v332, 0.0
    %v337 = vmax.f32 %v333, 0.0
    %v338 = vmax.f32 %v334, 0.0
    %339 = vst [vmem:[#allocation2] sm:$0x7] 0.0
    %vm340 = vcmask 256000
    %341 = vst.msk [vmem:[#allocation2 + $0x8] sm:$0x7] %vm340, 0.0
    %342 = vst [vmem:[#allocation2 + $0x20] sm:$0x7] 0.0
    %343 = vst.msk [vmem:[#allocation2 + $0x28] sm:$0x7] %vm340, 0.0
    %344 = vst [vmem:[#allocation2 + $0x10] sm:$0xf0] 0.0
    %vm345 = vcmask 261124
    %346 = vst.msk [vmem:[#allocation2 + $0x18] sm:$0xf0] %vm345, 0.0
    %347 = vst [vmem:[#allocation2 + $0x30] sm:$0xf0] 0.0
    %348 = vst.msk [vmem:[#allocation2 + $0x38] sm:$0xf0] %vm345, 0.0
    %v353 = vrot.slane %v335, 5
    %v354 = vrot.slane %v336, 5
    %v355 = vsel %vm35, %v353, %v354
    %v356 = vrot.slane %v337, 5
    %v357 = vrot.slane %v338, 5
    %v358 = vsel %vm35, %v356, %v357
    %vm363 = vcmask 162819
    %364 = vst.msk [vmem:[#allocation2] sm:$0xf8] %vm363, %v353
    %365 = vst.msk [vmem:[#allocation2 + $0x10] sm:$0xff] %vm268, %v355
    %366 = vst.msk [vmem:[#allocation2 + $0x20] sm:$0xf8] %vm363, %v356
    %367 = vst.msk [vmem:[#allocation2 + $0x30] sm:$0xff] %vm268, %v358
    %v368 = vrot.slane %v335, 6
    %v369 = vrot.slane %v336, 6
    %v370 = vsel %vm52, %v368, %v369
    %v371 = vrot.slane %v337, 6
    %v372 = vrot.slane %v338, 6
    %v373 = vsel %vm52, %v371, %v372
    %374 = vrot.lane.b32.xlu0 %v368, 20
    %v375 = vpop.permute.xlu0 %374
    %376 = vrot.lane.b32.xlu0 %v370, 20
    %v377 = vpop.permute.xlu0 %376
    %378 = vrot.lane.b32.xlu0 %v371, 20
    %v379 = vpop.permute.xlu0 %378
    %380 = vrot.lane.b32.xlu0 %v373, 20
    %v381 = vpop.permute.xlu0 %380
    %vm386 = vcmask 326818
    %387 = vst.msk [vmem:[#allocation2] sm:$0xfc] %vm386, %v375
    %vm388 = vcmask 326816
    %389 = vst.msk [vmem:[#allocation2 + $0x10] sm:$0xff] %vm388, %v377
    %390 = vst.msk [vmem:[#allocation2 + $0x20] sm:$0xfc] %vm386, %v379
    %391 = vst.msk [vmem:[#allocation2 + $0x30] sm:$0xff] %vm388, %v381
    %v392 = vrot.slane %v335, 7
    %v393 = vrot.slane %v336, 7
    %v394 = vsel %vm77, %v392, %v393
    %v395 = vrot.slane %v337, 7
    %v396 = vrot.slane %v338, 7
    %v397 = vsel %vm77, %v395, %v396
    %398 = vrot.lane.b32.xlu0 %v392, 40
    %v399 = vpop.permute.xlu0 %398
    %400 = vrot.lane.b32.xlu0 %v394, 40
    %v401 = vpop.permute.xlu0 %400
    %402 = vrot.lane.b32.xlu0 %v395, 40
    %v403 = vpop.permute.xlu0 %402
    %404 = vrot.lane.b32.xlu0 %v397, 40
    %v405 = vpop.permute.xlu0 %404
    %vm410 = vcmask 490817
    %411 = vst.msk [vmem:[#allocation2] sm:$0xfe] %vm410, %v399
    %vm412 = vcmask 490816
    %413 = vst.msk [vmem:[#allocation2 + $0x10] sm:$0xff] %vm412, %v401
    %414 = vst.msk [vmem:[#allocation2 + $0x20] sm:$0xfe] %vm410, %v403
    %415 = vst.msk [vmem:[#allocation2 + $0x30] sm:$0xff] %vm412, %v405
    %416 = vrot.lane.b32.xlu0 %v335, 60
    %v417 = vpop.permute.xlu0 %416
    %418 = vrot.lane.b32.xlu0 %v336, 60
    %v419 = vpop.permute.xlu0 %418
    %420 = vrot.lane.b32.xlu0 %v337, 60
    %v421 = vpop.permute.xlu0 %420
    %422 = vrot.lane.b32.xlu0 %v338, 60
    %v423 = vpop.permute.xlu0 %422
    %vm428 = vcmask 654816
    %429 = vst.msk [vmem:[#allocation2] sm:$0xff] %vm428, %v417
    %430 = vst.msk [vmem:[#allocation2 + $0x10] sm:$0xff] %vm428, %v419
    %431 = vst.msk [vmem:[#allocation2 + $0x20] sm:$0xff] %vm428, %v421
    %432 = vst.msk [vmem:[#allocation2 + $0x30] sm:$0xff] %vm428, %v423
    %v433 = vrot.slane %v335, 1
    %v434 = vrot.slane %v336, 1
    %v435 = vsel %vm119, %v433, %v434
    %v436 = vrot.slane %v337, 1
    %v437 = vrot.slane %v338, 1
    %v438 = vsel %vm119, %v436, %v437
    %439 = vrot.lane.b32.xlu0 %v435, 80
    %v440 = vpop.permute.xlu0 %439
    %441 = vrot.lane.b32.xlu0 %v434, 80
    %v442 = vpop.permute.xlu0 %441
    %443 = vrot.lane.b32.xlu0 %v438, 80
    %v444 = vpop.permute.xlu0 %443
    %445 = vrot.lane.b32.xlu0 %v437, 80
    %v446 = vpop.permute.xlu0 %445
    %vm451 = vcmask 818816
    %452 = vst.msk [vmem:[#allocation2] sm:$0xff] %vm451, %v440
    %vm453 = vcmask 817792
    %454 = vst.msk [vmem:[#allocation2 + $0x10] sm:$0x7f] %vm453, %v442
    %455 = vst.msk [vmem:[#allocation2 + $0x20] sm:$0xff] %vm451, %v444
    %456 = vst.msk [vmem:[#allocation2 + $0x30] sm:$0x7f] %vm453, %v446
    %v457 = vrot.slane %v335, 2
    %v458 = vrot.slane %v336, 2
    %v459 = vsel %vm144, %v457, %v458
    %v460 = vrot.slane %v337, 2
    %v461 = vrot.slane %v338, 2
    %v462 = vsel %vm144, %v460, %v461
    %463 = vrot.lane.b32.xlu0 %v459, 100
    %v464 = vpop.permute.xlu0 %463
    %465 = vrot.lane.b32.xlu0 %v458, 100
    %v466 = vpop.permute.xlu0 %465
    %467 = vrot.lane.b32.xlu0 %v462, 100
    %v468 = vpop.permute.xlu0 %467
    %469 = vrot.lane.b32.xlu0 %v461, 100
    %v470 = vpop.permute.xlu0 %469
    %vm475 = vcmask 982816
    %476 = vst.msk [vmem:[#allocation2] sm:$0xff] %vm475, %v464
    %vm477 = vcmask 980768
    %478 = vst.msk [vmem:[#allocation2 + $0x10] sm:$0x3f] %vm477, %v466
    %479 = vst.msk [vmem:[#allocation2 + $0x20] sm:$0xff] %vm475, %v468
    %480 = vst.msk [vmem:[#allocation2 + $0x30] sm:$0x3f] %vm477, %v470
    %v481 = vrot.slane %v335, 3
    %v482 = vrot.slane %v336, 3
    %v483 = vsel %vm169, %v481, %v482
    %v484 = vrot.slane %v337, 3
    %v485 = vrot.slane %v338, 3
    %v486 = vsel %vm169, %v484, %v485
    %487 = vrot.lane.b32.xlu0 %v483, 120
    %v488 = vpop.permute.xlu0 %487
    %489 = vrot.lane.b32.xlu0 %v482, 120
    %v490 = vpop.permute.xlu0 %489
    %491 = vrot.lane.b32.xlu0 %v486, 120
    %v492 = vpop.permute.xlu0 %491
    %493 = vrot.lane.b32.xlu0 %v485, 120
    %v494 = vpop.permute.xlu0 %493
    %vm499 = vcmask 1048512
    %500 = vst.msk [vmem:[#allocation2] sm:$0xff] %vm499, %v488
    %vm501 = vcmask 97280
    %502 = vst.msk [vmem:[#allocation2 + $0x8] sm:$0xff] %vm501, %v488
    %vm503 = vcmask 1045440
    %504 = vst.msk [vmem:[#allocation2 + $0x10] sm:$0x1f] %vm503, %v490
    %vm505 = vcmask 94208
    %506 = vst.msk [vmem:[#allocation2 + $0x18] sm:$0x1f] %vm505, %v490
    %507 = vst.msk [vmem:[#allocation2 + $0x20] sm:$0xff] %vm499, %v492
    %508 = vst.msk [vmem:[#allocation2 + $0x28] sm:$0xff] %vm501, %v492
    %509 = vst.msk [vmem:[#allocation2 + $0x30] sm:$0x1f] %vm503, %v494
    %510 = vst.msk [vmem:[#allocation2 + $0x38] sm:$0x1f] %vm505, %v494
    %v511 = vrot.slane %v335, 4
    %v512 = vrot.slane %v336, 4
    %v513 = vsel %vm194, %v511, %v512
    %v514 = vrot.slane %v337, 4
    %v515 = vrot.slane %v338, 4
    %v516 = vsel %vm194, %v514, %v515
    %517 = vrot.lane.b32.xlu0 %v513, 12
    %v518 = vpop.permute.xlu0 %517
    %519 = vrot.lane.b32.xlu0 %v512, 12
    %v520 = vpop.permute.xlu0 %519
    %521 = vrot.lane.b32.xlu0 %v516, 12
    %v522 = vpop.permute.xlu0 %521
    %523 = vrot.lane.b32.xlu0 %v515, 12
    %v524 = vpop.permute.xlu0 %523
    %vm529 = vcmask 261216
    %530 = vst.msk [vmem:[#allocation2 + $0x8] sm:$0xff] %vm529, %v518
    %vm531 = vcmask 257120
    %532 = vst.msk [vmem:[#allocation2 + $0x18] sm:$0xf] %vm531, %v520
    %533 = vst.msk [vmem:[#allocation2 + $0x28] sm:$0xff] %vm529, %v522
    %534 = vst.msk [vmem:[#allocation2 + $0x38] sm:$0xf] %vm531, %v524
    %v535 = vld [vmem:[#allocation2] sm:$0xff]
    %v536 = vld [vmem:[#allocation2 + $0x8] sm:$0xff]
    %v537 = vld [vmem:[#allocation2 + $0x10] sm:$0xff]
    %v538 = vld [vmem:[#allocation2 + $0x18] sm:$0xff]
    %v539 = vld [vmem:[#allocation2 + $0x20] sm:$0xff]
    %v540 = vld [vmem:[#allocation2 + $0x28] sm:$0xff]
    %v541 = vld [vmem:[#allocation2 + $0x30] sm:$0xff]
    %v542 = vld [vmem:[#allocation2 + $0x38] sm:$0xff]
    %v543 = vld [vmem:[%s2] sm:$0xff]
    %v544 = vld [vmem:[%s2 + $0x8] sm:$0xff]
    %v545 = vld [vmem:[%s2 + $0x10] sm:$0xff]
    %v546 = vld [vmem:[%s2 + $0x18] sm:$0xff]
    %v547 = vld [vmem:[%s2 + $0x20] sm:$0xff]
    %v548 = vld [vmem:[%s2 + $0x28] sm:$0xff]
    %v549 = vld [vmem:[%s2 + $0x30] sm:$0xff]
    %v550 = vld [vmem:[%s2 + $0x38] sm:$0xff]
    %v551 = vld [vmem:[%s2 + $0x40] sm:$0xff]
    %v552 = vld [vmem:[%s2 + $0x48] sm:$0xff]
    %v553 = vld [vmem:[%s2 + $0x50] sm:$0xff]
    %v554 = vld [vmem:[%s2 + $0x58] sm:$0xff]
    %v555 = vld [vmem:[%s2 + $0x60] sm:$0xff]
    %v556 = vld [vmem:[%s2 + $0x68] sm:$0xff]
    %v557 = vld [vmem:[%s2 + $0x70] sm:$0xff]
    %v558 = vld [vmem:[%s2 + $0x78] sm:$0xff]
    %v559 = vld [vmem:[%s2 + $0x80] sm:$0xff]
    %v560 = vld [vmem:[%s2 + $0x88] sm:$0xff]
    %v561 = vld [vmem:[%s2 + $0x90] sm:$0xff]
    %v562 = vld [vmem:[%s2 + $0x98] sm:$0xff]
    %vm563 = vcmask 261120
    %v565 = vsel %vm563, %v536, 0
    %v568 = vsel %vm563, %v538, 0
    %v571 = vsel %vm563, %v540, 0
    %v574 = vsel %vm563, %v542, 0
    %576 = vmatpush.msra.mxu0 %v558
    %577 = vmatpush.msra.mxu0 %v557
    %578 = vmatpush.msra.mxu0 %v556
    %579 = vmatpush.msra.mxu0 %v555
    %580 = vmatpush.msra.mxu0 %v554
    %581 = vmatpush.msra.mxu0 %v553
    %582 = vmatpush.msra.mxu0 %v552
    %583 = vmatpush.msra.mxu0 %v551
    %584 = vmatpush.msra.mxu0 %v550
    %585 = vmatpush.msra.mxu0 %v549
    %586 = vmatpush.msra.mxu0 %v548
    %587 = vmatpush.msra.mxu0 %v547
    %588 = vmatpush.msra.mxu0 %v546
    %589 = vmatpush.msra.mxu0 %v545
    %590 = vmatpush.msra.mxu0 %v544
    %591 = vmatpush.msra.mxu0 %v543
    %592 = vmatmul.f32.gmra.mxu0 %v535
    %v593 = vpop.f32.mrf.mxu0
    %v594 = vadd.f32 0.0, %v593
    %595 = vmatmul.f32.gmra.mxu0 %v537
    %v596 = vpop.f32.mrf.mxu0
    %v597 = vadd.f32 0.0, %v596
    %598 = vmatmul.f32.gmra.mxu0 %v539
    %v599 = vpop.f32.mrf.mxu0
    %v600 = vadd.f32 0.0, %v599
    %601 = vmatmul.f32.gmra.mxu0 %v541
    %v602 = vpop.f32.mrf.mxu0
    %v603 = vadd.f32 0.0, %v602
    %604 = vdwg.mxu0
    %605 = vmatpush.msra.mxu0 0.0
    %606 = vmatpush.msra.mxu0 0.0
    %607 = vmatpush.msra.mxu0 0.0
    %608 = vmatpush.msra.mxu0 0.0
    %609 = vmatpush.msra.mxu0 0.0
    %610 = vmatpush.msra.mxu0 0.0
    %611 = vmatpush.msra.mxu0 0.0
    %612 = vmatpush.msra.mxu0 0.0
    %613 = vmatpush.msra.mxu0 0.0
    %614 = vmatpush.msra.mxu0 0.0
    %615 = vmatpush.msra.mxu0 0.0
    %616 = vmatpush.msra.mxu0 0.0
    %617 = vmatpush.msra.mxu0 %v562
    %618 = vmatpush.msra.mxu0 %v561
    %619 = vmatpush.msra.mxu0 %v560
    %620 = vmatpush.msra.mxu0 %v559
    %621 = vmatmul.f32.gmra.mxu0 %v565
    %v622 = vpop.f32.mrf.mxu0
    %v623 = vadd.f32 %v594, %v622
    %624 = vmatmul.f32.gmra.mxu0 %v568
    %v625 = vpop.f32.mrf.mxu0
    %v626 = vadd.f32 %v597, %v625
    %627 = vmatmul.f32.gmra.mxu0 %v571
    %v628 = vpop.f32.mrf.mxu0
    %v629 = vadd.f32 %v600, %v628
    %630 = vmatmul.f32.gmra.mxu0 %v574
    %v631 = vpop.f32.mrf.mxu0
    %v632 = vadd.f32 %v603, %v631
    %633 = vdwg.mxu0
    %v634 = vsel %vm268, %v623, 0.0
    %v635 = vsel %vm268, %v626, 0.0
    %v636 = vadd.f32 %v634, %v635
    %v637 = vsel %vm268, %v629, 0.0
    %v638 = vadd.f32 %v636, %v637
    %v639 = vsel %vm268, %v632, 0.0
    %v640 = vadd.f32 %v638, %v639
    %v641 = vrot.slane %v640, 4
    %v642 = vadd.f32 %v640, %v641
    %v643 = vrot.slane %v642, 2
    %v644 = vadd.f32 %v642, %v643
    %v645 = vrot.slane %v644, 1
    %v646 = vadd.f32 %v644, %v645
    %v647 = vmul.f32 %v623, %v623
    %v648 = vmul.f32 %v626, %v626
    %v649 = vmul.f32 %v629, %v629
    %v650 = vmul.f32 %v632, %v632
    %v651 = vsel %vm268, %v647, 0.0
    %v652 = vsel %vm268, %v648, 0.0
    %v653 = vadd.f32 %v651, %v652
    %v654 = vsel %vm268, %v649, 0.0
    %v655 = vadd.f32 %v653, %v654
    %v656 = vsel %vm268, %v650, 0.0
    %v657 = vadd.f32 %v655, %v656
    %v658 = vrot.slane %v657, 4
    %v659 = vadd.f32 %v657, %v658
    %v660 = vrot.slane %v659, 2
    %v661 = vadd.f32 %v659, %v660
    %v662 = vrot.slane %v661, 1
    %v663 = vadd.f32 %v661, %v662
    %v664 = vmul.f32 %v646, 0.03125
    %v665 = vmul.f32 %v663, 0.03125
    %v666 = vmul.f32 %v664, %v664
    %v667 = vsub.f32 %v665, %v666
    %v668 = vmax.f32 %v667, 0.0
    %v669 = vld [vmem:[%s4 + $0x1] sm:$0x1]
    %v670 = vld [vmem:[%s4 + $0x3] sm:$0x1]
    %v671 = vsub.f32 %v623, %v664
    %v672 = vsub.f32 %v626, %v664
    %v673 = vsub.f32 %v629, %v664
    %v674 = vsub.f32 %v632, %v664
    %v675 = vadd.f32 %v668, 1e-05
    %v676 = vrsqrt.pop %v675
    %v677 = vmul.f32 %v676, %v675
    %v678 = vmul.f32 %v677, %v676
    %v679 = vmul.f32 0.5, %v678
    %v680 = vsub.f32 1.5, %v679
    %v681 = vmul.f32 %v676, %v680
    %vm682 = vweird.f32 %v675
    %vm683 = vweird.f32 %v676
    %vm684 = vmor %vm682, %vm683
    %v685 = vsel %vm684, %v676, %v681
    %v686 = vmul.f32 %v671, %v685
    %v687 = vmul.f32 %v672, %v685
    %v688 = vmul.f32 %v673, %v685
    %v689 = vmul.f32 %v674, %v685
    %v690 = vperm.slane %v669, 0
    %v691 = vmul.f32 %v686, %v690
    %v692 = vmul.f32 %v687, %v690
    %v693 = vmul.f32 %v688, %v690
    %v694 = vmul.f32 %v689, %v690
    %v695 = vperm.slane %v670, 0
    %v696 = vadd.f32 %v691, %v695
    %v697 = vadd.f32 %v692, %v695
    %v698 = vadd.f32 %v693, %v695
    %v699 = vadd.f32 %v694, %v695
    %v700 = vmax.f32 %v696, 0.0
    %v701 = vmax.f32 %v697, 0.0
    %v702 = vmax.f32 %v698, 0.0
    %v703 = vmax.f32 %v699, 0.0
    %v704 = vsel %vm268, %v700, 0.0
    %v705 = vsel %vm268, %v701, 0.0
    %v706 = vadd.f32 %v704, %v705
    %v707 = vrot.slane %v706, 4
    %v708 = vadd.f32 %v706, %v707
    %v709 = vrot.slane %v708, 2
    %v710 = vadd.f32 %v708, %v709
    %v711 = vrot.slane %v710, 1
    %v712 = vadd.f32 %v710, %v711
    %v713 = vsel %vm268, %v702, 0.0
    %v714 = vsel %vm268, %v703, 0.0
    %v715 = vadd.f32 %v713, %v714
    %v716 = vrot.slane %v715, 4
    %v717 = vadd.f32 %v715, %v716
    %v718 = vrot.slane %v717, 2
    %v719 = vadd.f32 %v717, %v718
    %v720 = vrot.slane %v719, 1
    %v721 = vadd.f32 %v719, %v720
    %v722 = vrcp.pop 16.0
    %v723 = vmul.f32 16.0, %v722
    %v724 = vsub.f32 1.0, %v723
    %v725 = vmul.f32 %v722, %v724
    %v726 = vadd.f32 %v722, %v725
    %vm727 = vweird.f32 %v722
    %v728 = vsel %vm727, %v722, %v726
    %v729 = vmul.f32 %v712, %v728
    %v730 = vmul.f32 %v721, %v728
    %v731 = vld [vmem:[%s4 + $0x4] sm:$0x1]
    %v732 = vld [vmem:[%s3] sm:$0xff]
    %v733 = vld [vmem:[%s3 + $0x8] sm:$0xff]
    %v734 = vld [vmem:[%s3 + $0x10] sm:$0xf]
    %v735 = vperm.slane %v731, 0
    %vm738 = vcmask 1041409
    %v739 = vsel %vm738, %v730, %v729
    %v740 = vsel %vm268, %v739, 0
    %v743 = vsel %vm194, %v734, 0
    %745 = vmatpush.msra.mxu0 0.0
    %746 = vmatpush.msra.mxu0 0.0
    %747 = vmatpush.msra.mxu0 0.0
    %748 = vmatpush.msra.mxu0 0.0
    %749 = vmatpush.msra.mxu0 0.0
    %750 = vmatpush.msra.mxu0 0.0
    %751 = vmatpush.msra.mxu0 0.0
    %752 = vmatpush.msra.mxu0 0.0
    %753 = vmatpush.msra.mxu0 0.0
    %754 = vmatpush.msra.mxu0 0.0
    %755 = vmatpush.msra.mxu0 0.0
    %756 = vmatpush.msra.mxu0 0.0
    %757 = vmatpush.msra.mxu0 0.0
    %758 = vmatpush.msra.mxu0 %v743
    %759 = vmatpush.msra.mxu0 %v733
    %760 = vmatpush.msra.mxu0 %v732
    %761 = vmatmul.f32.gmra.mxu0 %v740
    %v762 = vpop.f32.mrf.mxu0
    %v763 = vadd.f32 %v735, %v762
    %764 = vdwg.mxu0
    %vm765 = vcmask 82944
    %766 = vst.msk [vmem:[#allocation3] sm:$0x3] %vm765, %v763
    // Predicated region
    $region22: #{custom_model_forward.1} parent=1 // pred_check
      _
    $region23: #{custom_model_forward.1} parent=1 // pred_check_branch
      %768 = sbr.rel (0) target = $region25
    $region24: #{custom_model_forward.1} parent=1 // pred_region
      %770 = vsyncadd [#allocation4], 0
      %s772 = sshll.u32 [#allocation3], 4
      %s773 = int_to_ptr.vmem [resolvable:$true] %s772
      %s774 = sshll.u32 %s5, 4
      %s775 = int_to_ptr.hbm [resolvable:$true] %s774
      %777 = dma.vmem_to_hbm [thread:$0]  %s773, 32, %s775, [#allocation4]
    $region25: #{custom_model_forward.1} parent=1 // pred_fallthru
      _
    // Predicated region
    $region26: #{custom_model_forward.1} parent=1 // pred_check
      _
    $region27: #{custom_model_forward.1} parent=1 // pred_check_branch
      %779 = sbr.rel (0) target = $region29
    $region28: #{custom_model_forward.1} parent=1 // pred_region
      %781 = dma.done [#allocation4], 32
    $region29: #{custom_model_forward.1} parent=1 // pred_fallthru
      _
    %782 = vsyncpa [#allocation4], 1

</llo_original>
